<compile_context>
chip_gen: v7x
topology: tpu7x:2x2x1
jax: 0.10.0
libtpu: 0.0.40
codegen_flags: <defaults>
</compile_context>

<pallas_src>
import jax
import jax.numpy as jnp
from jax import lax
from jax.experimental import pallas as pl
from jax.experimental.pallas import tpu as pltpu


# --------------------------------------------------------------------------
# Kernel: LayerNormalization as written in the reference, per row tile.
#   out = scale * (x - mean) * rsqrt(var_unbiased)     with scale = a*b/eps
# --------------------------------------------------------------------------
def layernorm_kernel(scale_ref, x_ref, o_ref):
    x = x_ref[...].astype(jnp.float32)                  # (TM, D) -> f32 stats
    d = x.shape[-1]
    mean = jnp.mean(x, axis=-1, keepdims=True)
    xc = x - mean
    # torch .std() default: unbiased estimator (divide by D - 1)
    var = jnp.sum(xc * xc, axis=-1, keepdims=True) * (1.0 / (d - 1))
    inv = lax.rsqrt(var)                                 # single EUP op / row
    scale = scale_ref[0]                                 # alpha * bias / eps
    o_ref[...] = (scale * (xc * inv)).astype(o_ref.dtype)


# --------------------------------------------------------------------------
# Tiling helper + pallas_call wrapper
# --------------------------------------------------------------------------
_VMEM_LIMIT_BYTES = 32 * 1024 * 1024     # safe on v5e/v6e/v7x scoped VMEM
_MAX_BLOCK_BYTES = 4 * 1024 * 1024       # ~roofline-plateau block size


def _row_tile(n, d, itemsize, n_resident=2):
    """Row tile: byte-budgeted, sublane-aligned, and >=2 grid tiles if possible.

    n_resident = arrays live per grid step (LN: 1 in + 1 out). Double
    buffering doubles that, so per-block bytes are capped accordingly.
    """
    align = max(8, 32 // itemsize)        # 8 (f32) / 16 (bf16) / 32 (int8/fp8)
    if n <= align:
        return n                          # block == full dim -> always allowed
    row_bytes = d * itemsize
    per_block = min(_MAX_BLOCK_BYTES, _VMEM_LIMIT_BYTES // (2 * n_resident))
    tm = min(n, max(per_block // row_bytes, align))
    tm = max(align, (tm // align) * align)
    # v7x has 2 TensorCores sharing HBM: make sure the grid has >= 2 tiles.
    if pl.cdiv(n, tm) < 2:
        tm = max(align, ((tm // 2) // align) * align)
    return tm


def _layernorm_pallas(x2, scale):
    n, d = x2.shape
    itemsize = jnp.dtype(x2.dtype).itemsize
    tm = _row_tile(n, d, itemsize, n_resident=2)
    grid = (pl.cdiv(n, tm),)
    return pl.pallas_call(
        layernorm_kernel,
        out_shape=jax.ShapeDtypeStruct((n, d), x2.dtype),
        grid=grid,
        in_specs=[
            pl.BlockSpec(memory_space=pltpu.MemorySpace.SMEM),   # scale (1,)
            pl.BlockSpec((tm, d), lambda i: (i, 0)),             # x row tile
        ],
        out_specs=pl.BlockSpec((tm, d), lambda i: (i, 0)),
        compiler_params=pltpu.CompilerParams(
            dimension_semantics=("parallel",),
            vmem_limit_bytes=_VMEM_LIMIT_BYTES),
        cost_estimate=pl.CostEstimate(
            flops=6 * n * d,
            transcendentals=n,
            bytes_accessed=2 * n * d * itemsize),
    )(scale, x2)


def residual_connection(x, sublayer, alpha, bias, *, eps=1e-6, dropout_p=0.0):
    """ResidualConnection.forward: x + dropout(sublayer(norm(x)))."""
    del dropout_p  # TODO(synk): nn.Dropout is identity at inference; the
    #               reference stores a float and is not callable as written.
    orig_shape = x.shape
    d = orig_shape[-1]
    x2 = x.reshape(-1, d)

    # Fold alpha * bias / eps into one scalar (passed through SMEM).
    scale = (alpha.astype(jnp.float32) * bias.astype(jnp.float32) *
             jnp.float32(1.0 / eps)).reshape(1)

    normed = _layernorm_pallas(x2, scale).reshape(orig_shape)

    # TODO(synk): `sublayer` is an arbitrary callable; it cannot be traced
    # inside a Pallas kernel, so it runs as regular JAX between kernels.
    s = sublayer(normed)

    # Residual add in plain JAX: XLA fuses it into the sublayer's epilogue,
    # avoiding a separate HBM streaming kernel (per perf review).
    return x + s


# --------------------------------------------------------------------------
# Pure-JAX reference of the PyTorch forward
# --------------------------------------------------------------------------
def ref_residual_connection(x, sublayer, alpha, bias, eps=1e-6):
    mean = jnp.mean(x, axis=-1, keepdims=True)
    std = jnp.std(x, axis=-1, keepdims=True, ddof=1)      # torch unbiased std
    normed = alpha[0] * (x - mean) / (std * eps) * bias[0]
    return x + sublayer(normed)                           # dropout == identity


# --------------------------------------------------------------------------
# Self-test
# --------------------------------------------------------------------------
if __name__ == "__main__":
    eps = 1e-6
    drop_p = 0.1   # identity at inference

    key = jax.random.PRNGKey(0)
    kx, kw, kx2 = jax.random.split(key, 3)

    # ---------------- f32 correctness test ----------------
    B, S, D = 2, 8, 32
    x = jax.random.normal(kx, (B, S, D), dtype=jnp.float32)

    # Module parameters. Default init is alpha=1, bias=0 (which zeroes the
    # norm output); use non-trivial values so the full formula is exercised.
    alpha = jnp.full((1,), 1.3, dtype=jnp.float32)
    bias = jnp.full((1,), 0.7, dtype=jnp.float32)

    # Example sublayer: a small linear map (the spec passes an arbitrary
    # callable). Tiny weights keep its output O(1) so the residual matters.
    W = 1e-6 * jax.random.normal(kw, (D, D), dtype=jnp.float32)
    sublayer = lambda h: h @ W

    out = residual_connection(x, sublayer, alpha, bias, eps=eps,
                              dropout_p=drop_p)
    out = jax.block_until_ready(out)

    expected = ref_residual_connection(x, sublayer, alpha, bias, eps=eps)
    assert out.shape == (B, S, D)
    max_err = float(jnp.max(jnp.abs(out - expected)))
    assert jnp.allclose(out, expected, atol=1e-4, rtol=1e-4), max_err

    # ---------------- bf16 smoke test (exercises dtype-aware tiling) --------
    B2, S2, D2 = 2, 24, 128
    xb = jax.random.normal(kx2, (B2, S2, D2), dtype=jnp.float32).astype(
        jnp.bfloat16)
    nb = _layernorm_pallas(xb.reshape(-1, D2),
                           (alpha * bias / eps).reshape(1).astype(jnp.float32))
    nb = jax.block_until_ready(nb)
    assert nb.shape == (B2 * S2, D2) and nb.dtype == jnp.bfloat16
    assert bool(jnp.all(jnp.isfinite(nb.astype(jnp.float32))))

    print("KERNEL_OK")
</pallas_src>

<mosaic_0001>
module attributes {stable_mosaic.version = 11 : i64} {
  func.func @layernorm_kernel(%arg0: i32, %arg1: memref<1xf32, #tpu.memory_space<smem>>, %arg2: memref<8x32xf32, #tpu.memory_space<vmem>>, %arg3: memref<8x32xf32, #tpu.memory_space<vmem>>) attributes {dimension_semantics = [#tpu.dimension_semantics<parallel>], iteration_bounds = array<i64: 2>, scalar_prefetch = 0 : i64, scratch_operands = 0 : i64, tpu.core_type = #tpu.core_type<tc>, window_params = [{transform_indices = @transform_0, window_bounds = array<i64: 1>}, {transform_indices = @transform_1, window_bounds = array<i64: 8, 32>}, {transform_indices = @transform_2, window_bounds = array<i64: 8, 32>}]} {
    %c0 = arith.constant 0 : index
    %c0_0 = arith.constant 0 : index
    %0 = vector.load %arg2[%c0, %c0_0] : memref<8x32xf32, #tpu.memory_space<vmem>>, vector<8x32xf32>
    %cst = arith.constant dense<0.000000e+00> : vector<8xf32>
    %1 = vector.multi_reduction <add>, %0, %cst [1] : vector<8x32xf32> to vector<8xf32>
    %2 = vector.shape_cast %1 : vector<8xf32> to vector<8x1xf32>
    %cst_1 = arith.constant 3.200000e+01 : f32
    %3 = vector.broadcast %cst_1 : f32 to vector<8x1xf32>
    %4 = arith.divf %2, %3 : vector<8x1xf32>
    %5 = vector.broadcast %4 : vector<8x1xf32> to vector<8x32xf32>
    %6 = arith.subf %0, %5 : vector<8x32xf32>
    %7 = arith.mulf %6, %6 : vector<8x32xf32>
    %cst_2 = arith.constant dense<0.000000e+00> : vector<8xf32>
    %8 = vector.multi_reduction <add>, %7, %cst_2 [1] : vector<8x32xf32> to vector<8xf32>
    %9 = vector.shape_cast %8 : vector<8xf32> to vector<8x1xf32>
    %cst_3 = arith.constant 0.0322580636 : f32
    %10 = vector.broadcast %cst_3 : f32 to vector<8x1xf32>
    %11 = arith.mulf %9, %10 : vector<8x1xf32>
    %12 = math.rsqrt %11 : vector<8x1xf32>
    %c0_4 = arith.constant 0 : index
    %13 = memref.load %arg1[%c0_4] : memref<1xf32, #tpu.memory_space<smem>>
    %14 = vector.broadcast %12 : vector<8x1xf32> to vector<8x32xf32>
    %15 = arith.mulf %6, %14 : vector<8x32xf32>
    %16 = vector.broadcast %13 : f32 to vector<8x32xf32>
    %17 = arith.mulf %16, %15 : vector<8x32xf32>
    %c0_5 = arith.constant 0 : index
    %c0_6 = arith.constant 0 : index
    %18 = vector.load %arg3[%c0_5, %c0_6] : memref<8x32xf32, #tpu.memory_space<vmem>>, vector<8x32xf32>
    tpu.vector_store %arg3[%c0_5, %c0_6], %17 {strides = array<i32>} : memref<8x32xf32, #tpu.memory_space<vmem>>, vector<8x32xf32>,
    return
  }
  func.func @transform_0(%arg0: i32) -> i32 {
    %c0_i32 = arith.constant 0 : i32
    %c0_i32_0 = arith.constant 0 : i32
    return %c0_i32 : i32
  }
  func.func @transform_1(%arg0: i32) -> (i32, i32) {
    %c0_i32 = arith.constant 0 : i32
    %c0_i32_0 = arith.constant 0 : i32
    return %arg0, %c0_i32 : i32, i32
  }
  func.func @transform_2(%arg0: i32) -> (i32, i32) {
    %c0_i32 = arith.constant 0 : i32
    %c0_i32_0 = arith.constant 0 : i32
    return %arg0, %c0_i32 : i32, i32
  }
}

</mosaic_0001>

<llo_original>
// kernel: tpu_custom_call.1
$region0: #{tpu_custom_call.1}
  #allocation0 [shape = 'u32[]', space=smem, size = 0x4, offset = 0x4, fixed_abs, tag = 'smem constant byte address 0x4 - core index']
  #allocation1 [shape = 'u32[144,128]{1,0:T(1,128)}', space=vmem, size = 0x12000, scoped, tag = 'internal scratch']
  #allocation2 [shape = 'f32[1]{0:T(128)S(6)}', space=smem, size = 0x200, scoped, tag = 'scoped memory for tpu_custom_call.1']
  %s0 = inlined_call_operand.<no memory space> [shape: f32[1], index: 0, kind: input, shape index: {}]
  %s1 = inlined_call_operand.hbm [shape: f32[16,32], index: 1, kind: input, shape index: {}]
  %s2 = inlined_call_operand.hbm [shape: f32[16,32], index: 2, kind: output, shape index: {}]
  %s3 = sld [smem:[#allocation0]]
  $region45: #{tpu_custom_call.1} parent=0
    _
  %s5 = ssub.s32 1, %s3
  %s6 = scalar_select 0, %s5, %s3
  %7 = sst [smem:[#allocation2]] %s0
  $region1: #{tpu_custom_call.1} parent=0
    #allocation3 [shape = 'u8[8192]{0}', space=vmem, size = 0x2000, scoped, tag = 'input window, operand 1']
    #allocation4 [shape = 's32[2]{0}', space=sflag, size = 0x8, scoped, tag = 'scoped memory for tpu_custom_call.1']
    #allocation5 [shape = 's32[2]{0}', space=sflag, size = 0x8, scoped, tag = 'scoped memory for tpu_custom_call.1']
    #allocation6 [shape = 'u8[8192]{0}', space=vmem, size = 0x2000, scoped, tag = 'output window, operand 0']
    %8 = vsyncpa [#allocation4], 0
    %s9 = scalar_lea.sflag [#allocation4], 1
    %10 = vsyncpa %s9, 0
    %11 = vsyncpa [#allocation5], 0
    %s12 = scalar_lea.sflag [#allocation5], 1
    %13 = vsyncpa %s12, 0
    loop: start=0, step=1, limit=4
    $region2: #{tpu_custom_call.1} parent=1 // loop_pre_header
      _
    $region3: #{tpu_custom_call.1} parent=1 // loop_header
      %s15 = sphi 0, %s19
      %p16 = scmp.ge.s32.totalorder %s15, 4
      %s23 = sphi 0, %s23
      %s25 = sphi 0, %s23
      %s26 = sphi 0, %s25
      %s40 = sphi 0, %s26
      %s46 = sphi 0, %s48
      %s49 = sphi 0, %s46
      %s50 = sphi 0, %s49
      %s66 = sphi 0, %s50
      %s72 = sphi 0, %s74
      %s75 = sphi 0, %s72
      %s76 = sphi 0, %s75
      %s92 = sphi 0, %s76
    $region4: #{tpu_custom_call.1} parent=1 // loop_header_branch
      %18 = sbr.rel (%p16) target = $region8
    $region5: #{tpu_custom_call.1} parent=1 // loop_body
      %s20 = ssub.s32 %s15, 1
      %s21 = ssub.s32 %s15, 2
      %s22 = sadd.s32 %s15, 1
      %s24 = sadd.s32 %s23, 1
      %p27 = scmp.eq.s32.totalorder %s15, 1
      %p28 = scmp.ne.s32.totalorder %s23, %s25
      %p29 = scmp.eq.s32.totalorder %s15, 0
      %p30 = por %p28, %p29
      %p31 = scmp.ne.s32.totalorder %s23, %s25
      %p32 = scmp.eq.s32.totalorder %s20, 1
      %p33 = por %p31, %p32
      %p34 = scmp.ne.s32.totalorder %s25, %s26
      %p35 = scmp.eq.s32.totalorder %s20, 0
      %p36 = por %p34, %p35
      %p37 = scmp.ne.s32.totalorder %s25, %s26
      %p38 = scmp.eq.s32.totalorder %s21, 1
      %p39 = por %p37, %p38
      %p41 = scmp.ne.s32.totalorder %s26, %s40
      %p42 = scmp.eq.s32.totalorder %s21, 0
      %p43 = por %p41, %p42
      %s44 = ssub.s32 %s15, %s22
      %p45 = scmp.eq.s32.totalorder %s44, 0
      %s47 = sadd.s32 %s46, 1
      %s48 = scalar_select %p45, %s46, %s47
      %p51 = pneg %p45
      %p52 = scmp.eq.s32.totalorder %s15, 1
      %p53 = por %p51, %p52
      %p54 = scmp.ne.s32.totalorder %s46, %s49
      %p55 = scmp.eq.s32.totalorder %s15, 0
      %p56 = por %p54, %p55
      %p57 = scmp.ne.s32.totalorder %s46, %s49
      %p58 = scmp.eq.s32.totalorder %s20, 1
      %p59 = por %p57, %p58
      %p60 = scmp.ne.s32.totalorder %s49, %s50
      %p61 = scmp.eq.s32.totalorder %s20, 0
      %p62 = por %p60, %p61
      %p63 = scmp.ne.s32.totalorder %s49, %s50
      %p64 = scmp.eq.s32.totalorder %s21, 1
      %p65 = por %p63, %p64
      %p67 = scmp.ne.s32.totalorder %s50, %s66
      %p68 = scmp.eq.s32.totalorder %s21, 0
      %p69 = por %p67, %p68
      %s70 = ssub.s32 %s15, %s22
      %p71 = scmp.eq.s32.totalorder %s70, 0
      %s73 = sadd.s32 %s72, 1
      %s74 = scalar_select %p71, %s72, %s73
      %p77 = pneg %p71
      %p78 = scmp.eq.s32.totalorder %s15, 1
      %p79 = por %p77, %p78
      %p80 = scmp.ne.s32.totalorder %s72, %s75
      %p81 = scmp.eq.s32.totalorder %s15, 0
      %p82 = por %p80, %p81
      %p83 = scmp.ne.s32.totalorder %s72, %s75
      %p84 = scmp.eq.s32.totalorder %s20, 1
      %p85 = por %p83, %p84
      %p86 = scmp.ne.s32.totalorder %s75, %s76
      %p87 = scmp.eq.s32.totalorder %s20, 0
      %p88 = por %p86, %p87
      %p89 = scmp.ne.s32.totalorder %s75, %s76
      %p90 = scmp.eq.s32.totalorder %s21, 1
      %p91 = por %p89, %p90
      %p93 = scmp.ne.s32.totalorder %s76, %s92
      %p94 = scmp.eq.s32.totalorder %s21, 0
      %p95 = por %p93, %p94
      %p96 = scmp.le.s32.totalorder 1, %s15
      %p97 = scmp.lt.s32.totalorder %s15, 3
      %p98 = pnand %p96, %p97
      %p99 = pneg %p98
      // Predicated region
      $region9: #{tpu_custom_call.1} parent=5 // pred_check
        _
      $region10: #{tpu_custom_call.1} parent=5 // pred_check_branch
        %101 = sbr.rel (%p98) target = $region12
      $region11: #{tpu_custom_call.1} parent=5 // pred_region
        %s102 = ssub.s32 %s15, 1
        // Predicated region
        $region13: #{tpu_custom_call.1} parent=11 // pred_check
          %p103 = pneg %p36
        $region14: #{tpu_custom_call.1} parent=11 // pred_check_branch
          %105 = sbr.rel (%p103) target = $region16
        $region15: #{tpu_custom_call.1} parent=11 // pred_region
          _
        $region16: #{tpu_custom_call.1} parent=11 // pred_fallthru
          _
      $region12: #{tpu_custom_call.1} parent=5 // pred_fallthru
        _
      %p106 = scmp.lt.s32.totalorder %s15, 2
      // Predicated region
      $region17: #{tpu_custom_call.1} parent=5 // pred_check
        %p107 = pneg %p106
      $region18: #{tpu_custom_call.1} parent=5 // pred_check_branch
        %109 = sbr.rel (%p107) target = $region20
      $region19: #{tpu_custom_call.1} parent=5 // pred_region
        // Predicated region
        $region21: #{tpu_custom_call.1} parent=19 // pred_check
          %p110 = pneg %p56
        $region22: #{tpu_custom_call.1} parent=19 // pred_check_branch
          %112 = sbr.rel (%p110) target = $region24
        $region23: #{tpu_custom_call.1} parent=19 // pred_region
          %s113 = sand.u32 %s46, 1
          %s114 = scalar_lea.sflag [#allocation4], %s113
          %s115 = sand.u32 %s46, 1
          %s116 = smul.addr %s115, 8
          %s117 = scalar_lea.vmem [#allocation3], %s116
          %s119 = ssub.s32 128, 128
          %120 = vsyncadd %s114, %s119
          %s121 = smul.addr %s15, 128
          %s122 = scalar_lea.hbm %s1, %s121
          %s124 = sshll.u32 %s117, 4
          %s125 = int_to_ptr.vmem [resolvable:$true] %s124
          %127 = dma.hbm_to_vmem [thread:$0]  %s122, 128, %s125, %s114
        $region24: #{tpu_custom_call.1} parent=19 // pred_fallthru
          _
      $region20: #{tpu_custom_call.1} parent=5 // pred_fallthru
        _
      %p128 = scmp.le.s32.totalorder 1, %s15
      %p129 = scmp.lt.s32.totalorder %s15, 3
      %p130 = pnand %p128, %p129
      %p131 = pneg %p130
      // Predicated region
      $region25: #{tpu_custom_call.1} parent=5 // pred_check
        _
      $region26: #{tpu_custom_call.1} parent=5 // pred_check_branch
        %133 = sbr.rel (%p130) target = $region28
      $region27: #{tpu_custom_call.1} parent=5 // pred_region
        %s134 = ssub.s32 %s15, 1
        %s135 = sand.u32 %s49, 1
        %s136 = scalar_lea.sflag [#allocation4], %s135
        %s137 = sand.u32 %s49, 1
        %s138 = smul.addr %s137, 8
        %s139 = scalar_lea.vmem [#allocation3], %s138
        // Predicated region
        $region29: #{tpu_custom_call.1} parent=27 // pred_check
          %p140 = pneg %p62
        $region30: #{tpu_custom_call.1} parent=27 // pred_check_branch
          %142 = sbr.rel (%p140) target = $region32
        $region31: #{tpu_custom_call.1} parent=27 // pred_region
          %143 = dma.done %s136, 128
        $region32: #{tpu_custom_call.1} parent=27 // pred_fallthru
          _
        %p144 = pneg %p36
        %p145 = pneg %p33
        %s146 = sand.u32 %s49, 1
        %s147 = scalar_lea.sflag [#allocation4], %s146
        %s148 = sand.u32 %s49, 1
        %s149 = smul.addr %s148, 8
        %s150 = scalar_lea.vmem [#allocation3], %s149
        %p151 = pneg %p62
        %p152 = pneg %p59
        %p153 = pneg %p88
        %p154 = pneg %p85
        %s155 = sand.u32 %s75, 1
        %s156 = scalar_lea.sflag [#allocation5], %s155
        %s157 = sand.u32 %s75, 1
        %s158 = smul.addr %s157, 8
        %s159 = scalar_lea.vmem [#allocation6], %s158
        %v160 = vld [vmem:[%s139] sm:$0xff]
        %vm161 = vcmask 261120
        %v162 = vsel %vm161, %v160, 0.0
        %163 = vadd.xlane.f32.xlu0 %v162
        %v164 = vpop.xlane.xlu0 %163
        %v165 = vrcp.pop 32.0
        %v166 = vmul.f32 %v164, %v165
        %v167 = vsub.f32 %v160, %v166
        %v168 = vmul.f32 %v167, %v167
        %v169 = vsel %vm161, %v168, 0.0
        %170 = vadd.xlane.f32.xlu0 %v169
        %v171 = vpop.xlane.xlu0 %170
        %v172 = vmul.f32 %v171, 0.032258064
        %v173 = vrsqrt.pop %v172
        %s174 = sld [smem:[#allocation2]]
        %v175 = vmul.f32 %v167, %v173
        %v176 = vstv %s174
        %v177 = vmul.f32 %v176, %v175
        %178 = vst.msk [vmem:[%s159] sm:$0xff] %vm161, %v177
        %s179 = sand.u32 %s75, 1
        %s180 = scalar_lea.sflag [#allocation5], %s179
        %s181 = sand.u32 %s75, 1
        %s182 = smul.addr %s181, 8
        %s183 = scalar_lea.vmem [#allocation6], %s182
        // Predicated region
        $region33: #{tpu_custom_call.1} parent=27 // pred_check
          %p184 = pneg %p85
        $region34: #{tpu_custom_call.1} parent=27 // pred_check_branch
          %186 = sbr.rel (%p184) target = $region36
        $region35: #{tpu_custom_call.1} parent=27 // pred_region
          %s188 = ssub.s32 128, 128
          %189 = vsyncadd %s180, %s188
          %s190 = smul.addr %s20, 128
          %s191 = scalar_lea.hbm %s2, %s190
          %s193 = sshll.u32 %s183, 4
          %s194 = int_to_ptr.vmem [resolvable:$true] %s193
          %196 = dma.vmem_to_hbm [thread:$0]  %s194, 128, %s191, %s180
        $region36: #{tpu_custom_call.1} parent=27 // pred_fallthru
          _
      $region28: #{tpu_custom_call.1} parent=5 // pred_fallthru
        _
      %p197 = scmp.le.s32.totalorder 2, %s15
      // Predicated region
      $region37: #{tpu_custom_call.1} parent=5 // pred_check
        %p198 = pneg %p197
      $region38: #{tpu_custom_call.1} parent=5 // pred_check_branch
        %200 = sbr.rel (%p198) target = $region40
      $region39: #{tpu_custom_call.1} parent=5 // pred_region
        %s201 = ssub.s32 %s15, 2
        // Predicated region
        $region41: #{tpu_custom_call.1} parent=39 // pred_check
          %p202 = pneg %p91
        $region42: #{tpu_custom_call.1} parent=39 // pred_check_branch
          %204 = sbr.rel (%p202) target = $region44
        $region43: #{tpu_custom_call.1} parent=39 // pred_region
          %s205 = sand.u32 %s76, 1
          %s206 = scalar_lea.sflag [#allocation5], %s205
          %s207 = sand.u32 %s76, 1
          %s208 = smul.addr %s207, 8
          %s209 = scalar_lea.vmem [#allocation6], %s208
          %210 = dma.done %s206, 128
        $region44: #{tpu_custom_call.1} parent=39 // pred_fallthru
          _
      $region40: #{tpu_custom_call.1} parent=5 // pred_fallthru
        _
    $region6: #{tpu_custom_call.1} parent=1 // loop_footer
      %s19 = sadd.s32 1, %s15
    $region7: #{tpu_custom_call.1} parent=1 // loop_footer_branch
      %14 = sbr.rel target = $region3
    $region8: #{tpu_custom_call.1} parent=1 // loop_exit
      _
    %211 = vsyncpa [#allocation4], 1
    %s212 = scalar_lea.sflag [#allocation4], 1
    %213 = vsyncpa %s212, 1
    %214 = vsyncpa [#allocation5], 1
    %s215 = scalar_lea.sflag [#allocation5], 1
    %216 = vsyncpa %s215, 1

</llo_original>
